<compile_context>
chip_gen: v7x
topology: tpu7x:2x2x1
jax: 0.10.0
libtpu: 0.0.40
codegen_flags: <defaults>
</compile_context>

<pallas_src>
import math

import numpy as np
import jax
import jax.numpy as jnp
from jax.experimental import pallas as pl
from jax.experimental.pallas import tpu as pltpu


def _round_up(n, m):
    return ((n + m - 1) // m) * m


# ----------------------------------------------------------------------------
# Pallas kernel: MoG log_prob for one lane-dense batch tile.
#
#   xt  : (D, TB)   tile of x^T (streamed / pipelined over the grid)
#   W   : (K, 2D)   rows k = [ -0.5 * inv_var_k | mu_k * inv_var_k ]
#   c   : (K, 1)    0.5 * sum_d mu_kd^2 * inv_var_kd       (clamp offset)
#   b   : (K, 1)    log_softmax(pi)_k - sum_d log std_kd - (D/2) log(2*pi)
#   out : (1, TB)   log p(x_t) = logsumexp_k [ min(W@A - c, 0) + b ]
# ----------------------------------------------------------------------------
def _mog_logprob_kernel(xt_ref, w_ref, c_ref, b_ref, out_ref):
    xt = xt_ref[...].astype(jnp.float32)                        # (D, TB)
    a = jnp.concatenate([xt * xt, xt], axis=0)                  # (2D, TB)
    # Single fused MXU pass: s[k,t] = -0.5*sum_d x^2*iv + sum_d x*mu*iv
    s = jnp.dot(w_ref[...], a, preferred_element_type=jnp.float32)   # (K, TB)
    # s - c == -0.5 * sum_d ((x - mu)/std)^2 ; clamp at 0 against cancellation.
    z = jnp.minimum(s - c_ref[...], 0.0) + b_ref[...]           # (K, TB)
    m = jnp.max(z, axis=0, keepdims=True)                       # (1, TB)
    out_ref[...] = m + jnp.log(jnp.sum(jnp.exp(z - m), axis=0, keepdims=True))


def mog_log_prob(x, W, c, b, *, block_batch=512):
    """log p(x) under the MoG whose precomputed parameters are (W, c, b)."""
    B, D = x.shape
    K = W.shape[0]
    # Tile choice: one full (8-padded) tile for small batches, otherwise
    # lane-dense multiples of 128 so every block dim is either a full array
    # dim or a multiple of the native (8, 128) tiling.
    if B <= block_batch:
        TB = _round_up(max(B, 1), 8)
    else:
        TB = _round_up(block_batch, 128)
    B_pad = _round_up(B, TB)
    G = B_pad // TB

    # Zero-pad the batch and move it onto the lane (minor) axis.
    xt = jnp.pad(x.astype(jnp.float32), ((0, B_pad - B), (0, 0))).T   # (D, B_pad)

    out = pl.pallas_call(
        _mog_logprob_kernel,
        out_shape=jax.ShapeDtypeStruct((G, TB), jnp.float32),
        grid=(G,),
        in_specs=[
            pl.BlockSpec((D, TB), lambda i: (0, i)),      # streamed batch tile
            pl.BlockSpec((K, 2 * D), lambda i: (0, 0)),   # resident parameters
            pl.BlockSpec((K, 1), lambda i: (0, 0)),
            pl.BlockSpec((K, 1), lambda i: (0, 0)),
        ],
        out_specs=pl.BlockSpec((1, TB), lambda i: (i, 0)),  # lane-dense rows
        compiler_params=pltpu.CompilerParams(
            dimension_semantics=("parallel",),              # megacore-shardable
            vmem_limit_bytes=32 * 1024 * 1024,              # fits all gens (v7x: 64 MiB phys)
        ),
        cost_estimate=pl.CostEstimate(
            flops=2 * B_pad * (2 * D) * K,
            transcendentals=B_pad * (K + 1),
            bytes_accessed=(B_pad * D + B_pad + K * (2 * D + 2)) * 4,
        ),
    )(xt, W, c, b)
    return out.reshape(B_pad)[:B]


# ----------------------------------------------------------------------------
# One-time parameter precompute (plain JAX): everything that only depends on
# (mu, var, pi) is hoisted out of the per-batch-tile hot path.
# ----------------------------------------------------------------------------
def mog_precompute(mu, var_raw, logits):
    mu = mu.astype(jnp.float32)
    var = jax.nn.softplus(var_raw.astype(jnp.float32)) + 1e-8     # (K, D)
    stds = jnp.sqrt(var)
    inv_var = 1.0 / var
    D = mu.shape[-1]
    W = jnp.concatenate([-0.5 * inv_var, mu * inv_var], axis=-1)  # (K, 2D)
    c = 0.5 * jnp.sum(mu * mu * inv_var, axis=-1, keepdims=True)  # (K, 1)
    b = (jax.nn.log_softmax(logits.astype(jnp.float32))[:, None]
         - 0.5 * jnp.sum(jnp.log(var), axis=-1, keepdims=True)
         - 0.5 * D * math.log(2.0 * math.pi))                     # (K, 1)
    return stds, W, c, b


# ----------------------------------------------------------------------------
# Distribution / prior / VAE glue (plain JAX except the log_prob kernel)
# ----------------------------------------------------------------------------
class MixtureOfGaussiansPallas:
    """Mixture of diagonal Gaussians whose log_prob is a Pallas TPU kernel."""

    def __init__(self, mixture_logits, means, stds, W, c, b, block_batch=512):
        self.mixture_logits = mixture_logits     # (K,)
        self.means = means                       # (K, D)
        self.stds = stds                         # (K, D)
        self._W, self._c, self._b = W, c, b
        self._block_batch = block_batch

    def log_prob(self, value):                   # (B, D) -> (B,)
        return mog_log_prob(value, self._W, self._c, self._b,
                            block_batch=self._block_batch)

    @property
    def mean(self):
        w = jax.nn.softmax(self.mixture_logits, axis=-1)
        return jnp.sum(w[:, None] * self.means, axis=-2)

    def sample(self, key, n_samples=1):          # plain-JAX glue (not hot path)
        kc, kn = jax.random.split(key)
        comp = jax.random.categorical(kc, self.mixture_logits, shape=(n_samples,))
        eps = jax.random.normal(kn, (n_samples, self.means.shape[-1]), jnp.float32)
        return self.means[comp] + self.stds[comp] * eps


class VMMPriorPallas:
    """Mirrors VMMPrior: learnable (mu, var, pi); forward() builds the MoG."""

    def __init__(self, d_z, n_comp, mu, key, multiplier=1.0, block_batch=512):
        self.d_z, self.n_comp = d_z, n_comp
        self.mu = mu.astype(jnp.float32)                                   # (K, D)
        self.var = jax.random.normal(key, (n_comp, d_z), dtype=jnp.float32)
        self.pi = jnp.zeros((n_comp,), dtype=jnp.float32)
        self._block_batch = block_batch

    def forward(self):
        stds, W, c, b = mog_precompute(self.mu, self.var, self.pi)
        return MixtureOfGaussiansPallas(self.pi, self.mu, stds, W, c, b,
                                        block_batch=self._block_batch)

    def __call__(self):
        return self.forward()


def _diag_normal_log_prob(value, mean, std):
    return jnp.sum(-0.5 * ((value - mean) / std) ** 2 - jnp.log(std)
                   - 0.5 * math.log(2.0 * math.pi), axis=-1)


class GaussianEncoder:
    """Plain-JAX glue: amortized diagonal-Gaussian q(z|x) (fixed linear maps)."""

    def __init__(self, key, x_dim, d_z):
        k1, k2 = jax.random.split(key)
        self.w_mean = 0.1 * jax.random.normal(k1, (x_dim, d_z), dtype=jnp.float32)
        self.w_rstd = 0.01 * jax.random.normal(k2, (x_dim, d_z), dtype=jnp.float32)

    def __call__(self, x):
        mean = x @ self.w_mean
        std = jax.nn.softplus(x @ self.w_rstd) + 1e-3
        return mean, std


class GaussianDecoder:
    """Plain-JAX glue: p(x|z) = N(z @ W, 1)."""

    def __init__(self, key, d_z, x_dim):
        self.w = 0.1 * jax.random.normal(key, (d_z, x_dim), dtype=jnp.float32)

    def log_prob(self, x, z):
        return _diag_normal_log_prob(x, z @ self.w, 1.0)


class VAEPallas:
    """Mirrors the torch VAE: forward(x) = -elbo(x).

    td.kl_divergence(q, MoG prior) has no closed form, so the KL term is a
    single-sample Monte-Carlo estimate log q(z|x) - log p_prior(z); the prior
    log_prob runs as the Pallas kernel above.
    """

    def __init__(self, prior, decoder, encoder, beta=1.0):
        self.prior = prior
        self.decoder = decoder
        self.encoder = encoder
        self.beta = beta

    def elbo(self, x, key):
        mean_q, std_q = self.encoder(x)
        z = mean_q + std_q * jax.random.normal(key, mean_q.shape, jnp.float32)  # q.rsample()
        p = self.prior()                                    # MoG prior (precompute)
        log_q = _diag_normal_log_prob(z, mean_q, std_q)     # (B,)
        log_p = p.log_prob(z)                               # (B,)  Pallas kernel
        recon = self.decoder.log_prob(x, z)                 # (B,)
        kl_mc = log_q - log_p
        return jnp.mean(recon - self.beta * kl_mc, axis=0)

    def forward(self, x, key):
        return -self.elbo(x, key)

    # TODO(synk): VAE.sample / pca_posterior / pca_prior need decoder sampling
    # and sklearn PCA on host; they are glue outside the kernel scope.


# ----------------------------------------------------------------------------
# Pure-JAX references for validation
# ----------------------------------------------------------------------------
def ref_stds(var_raw):
    return jnp.sqrt(jax.nn.softplus(var_raw) + 1e-8)


def ref_log_prob(x, mu, var_raw, logits):
    stds = ref_stds(var_raw)
    lp = (-0.5 * ((x[:, None, :] - mu[None]) / stds[None]) ** 2
          - jnp.log(stds[None]) - 0.5 * jnp.log(2.0 * jnp.pi))   # (B, K, D)
    lpc = lp.sum(axis=-1)                                        # (B, K)
    lw = jax.nn.log_softmax(logits, axis=-1)                     # (K,)
    return jax.scipy.special.logsumexp(lw[None, :] + lpc, axis=-1)


if __name__ == "__main__":
    d_z, n_comp, x_dim = 32, 8, 16
    key = jax.random.PRNGKey(0)
    k_mu, k_var, k_enc, k_dec, k_z, k_zbig, k_x, k_eps = jax.random.split(key, 8)

    mu = jax.random.normal(k_mu, (n_comp, d_z), dtype=jnp.float32)
    prior = VMMPriorPallas(d_z, n_comp, mu, k_var, block_batch=128)

    # --- prior forward: hoisted parameter precompute (stds etc.) -----------
    dist = prior()
    np.testing.assert_allclose(np.asarray(dist.stds),
                               np.asarray(ref_stds(prior.var)),
                               rtol=1e-5, atol=1e-6)

    # --- log_prob kernel: single-tile path (small batch, G = 1) ------------
    z_small = jax.random.normal(k_z, (16, d_z), dtype=jnp.float32)
    lp_small = jax.block_until_ready(dist.log_prob(z_small))
    np.testing.assert_allclose(
        np.asarray(lp_small),
        np.asarray(ref_log_prob(z_small, prior.mu, prior.var, prior.pi)),
        rtol=1e-4, atol=1e-4)

    # --- log_prob kernel: multi-tile pipelined path (G = 3, with padding) --
    z_big = jax.random.normal(k_zbig, (300, d_z), dtype=jnp.float32)
    lp_big = jax.block_until_ready(dist.log_prob(z_big))
    np.testing.assert_allclose(
        np.asarray(lp_big),
        np.asarray(ref_log_prob(z_big, prior.mu, prior.var, prior.pi)),
        rtol=1e-4, atol=1e-4)

    # --- full VAE forward (-ELBO), mirroring the torch module --------------
    encoder = GaussianEncoder(k_enc, x_dim, d_z)
    decoder = GaussianDecoder(k_dec, d_z, x_dim)
    vae = VAEPallas(prior, decoder, encoder, beta=1.0)
    x = jax.random.normal(k_x, (16, x_dim), dtype=jnp.float32)
    loss = jax.block_until_ready(vae.forward(x, k_eps))
    assert np.isfinite(np.asarray(loss)), "VAE forward produced non-finite loss"

    print("KERNEL_OK")
</pallas_src>

<mosaic_0001>
module attributes {stable_mosaic.version = 11 : i64} {
  func.func @_mog_logprob_kernel(%arg0: i32, %arg1: memref<32x16xf32, #tpu.memory_space<vmem>>, %arg2: memref<8x64xf32, #tpu.memory_space<vmem>>, %arg3: memref<8x1xf32, #tpu.memory_space<vmem>>, %arg4: memref<8x1xf32, #tpu.memory_space<vmem>>, %arg5: memref<1x16xf32, #tpu.memory_space<vmem>>) attributes {dimension_semantics = [#tpu.dimension_semantics<parallel>], iteration_bounds = array<i64: 1>, scalar_prefetch = 0 : i64, scratch_operands = 0 : i64, tpu.core_type = #tpu.core_type<tc>, window_params = [{transform_indices = @transform_0, window_bounds = array<i64: 32, 16>}, {pipeline_mode = #tpu.pipeline_mode<synchronous>, transform_indices = @transform_1, window_bounds = array<i64: 8, 64>}, {pipeline_mode = #tpu.pipeline_mode<synchronous>, transform_indices = @transform_2, window_bounds = array<i64: 8, 1>}, {pipeline_mode = #tpu.pipeline_mode<synchronous>, transform_indices = @transform_3, window_bounds = array<i64: 8, 1>}, {transform_indices = @transform_4, window_bounds = array<i64: 1, 16>}]} {
    %c0 = arith.constant 0 : index
    %c0_0 = arith.constant 0 : index
    %0 = vector.load %arg1[%c0, %c0_0] : memref<32x16xf32, #tpu.memory_space<vmem>>, vector<32x16xf32>
    %1 = arith.mulf %0, %0 : vector<32x16xf32>
    %2 = tpu.concatenate %1, %0 in 0 : vector<32x16xf32>, vector<32x16xf32> -> vector<64x16xf32>
    %c0_1 = arith.constant 0 : index
    %c0_2 = arith.constant 0 : index
    %3 = vector.load %arg2[%c0_1, %c0_2] : memref<8x64xf32, #tpu.memory_space<vmem>>, vector<8x64xf32>
    %cst = arith.constant dense<0.000000e+00> : vector<8x16xf32>
    %4 = tpu.matmul %3, %2, %cst {dimension_numbers = #tpu.dot_dimension_numbers<[1], [0], [0], [1], [0, 0, 1, 1], [], []>} : vector<8x64xf32>, vector<64x16xf32>, vector<8x16xf32> -> vector<8x16xf32>
    %c0_3 = arith.constant 0 : index
    %c0_4 = arith.constant 0 : index
    %5 = vector.load %arg3[%c0_3, %c0_4] : memref<8x1xf32, #tpu.memory_space<vmem>>, vector<8x1xf32>
    %6 = vector.broadcast %5 : vector<8x1xf32> to vector<8x16xf32>
    %7 = arith.subf %4, %6 : vector<8x16xf32>
    %cst_5 = arith.constant 0.000000e+00 : f32
    %8 = vector.broadcast %cst_5 : f32 to vector<8x16xf32>
    %9 = arith.minimumf %7, %8 : vector<8x16xf32>
    %c0_6 = arith.constant 0 : index
    %c0_7 = arith.constant 0 : index
    %10 = vector.load %arg4[%c0_6, %c0_7] : memref<8x1xf32, #tpu.memory_space<vmem>>, vector<8x1xf32>
    %11 = vector.broadcast %10 : vector<8x1xf32> to vector<8x16xf32>
    %12 = arith.addf %9, %11 : vector<8x16xf32>
    %cst_8 = arith.constant dense<0xFF800000> : vector<16xf32>
    %13 = vector.multi_reduction <maximumf>, %12, %cst_8 [0] : vector<8x16xf32> to vector<16xf32>
    %14 = vector.shape_cast %13 : vector<16xf32> to vector<1x16xf32>
    %15 = vector.broadcast %14 : vector<1x16xf32> to vector<8x16xf32>
    %16 = arith.subf %12, %15 : vector<8x16xf32>
    %17 = math.exp %16 : vector<8x16xf32>
    %cst_9 = arith.constant dense<0.000000e+00> : vector<16xf32>
    %18 = vector.multi_reduction <add>, %17, %cst_9 [0] : vector<8x16xf32> to vector<16xf32>
    %19 = vector.shape_cast %18 : vector<16xf32> to vector<1x16xf32>
    %20 = math.log %19 : vector<1x16xf32>
    %21 = arith.addf %14, %20 : vector<1x16xf32>
    %c0_10 = arith.constant 0 : index
    %c0_11 = arith.constant 0 : index
    %22 = vector.load %arg5[%c0_10, %c0_11] : memref<1x16xf32, #tpu.memory_space<vmem>>, vector<1x16xf32>
    tpu.vector_store %arg5[%c0_10, %c0_11], %21 {strides = array<i32>} : memref<1x16xf32, #tpu.memory_space<vmem>>, vector<1x16xf32>,
    return
  }
  func.func @transform_0(%arg0: i32) -> (i32, i32) {
    %c0_i32 = arith.constant 0 : i32
    %c0_i32_0 = arith.constant 0 : i32
    return %c0_i32, %arg0 : i32, i32
  }
  func.func @transform_1(%arg0: i32) -> (i32, i32) {
    %c0_i32 = arith.constant 0 : i32
    %c0_i32_0 = arith.constant 0 : i32
    %c0_i32_1 = arith.constant 0 : i32
    return %c0_i32, %c0_i32_0 : i32, i32
  }
  func.func @transform_2(%arg0: i32) -> (i32, i32) {
    %c0_i32 = arith.constant 0 : i32
    %c0_i32_0 = arith.constant 0 : i32
    %c0_i32_1 = arith.constant 0 : i32
    return %c0_i32, %c0_i32_0 : i32, i32
  }
  func.func @transform_3(%arg0: i32) -> (i32, i32) {
    %c0_i32 = arith.constant 0 : i32
    %c0_i32_0 = arith.constant 0 : i32
    %c0_i32_1 = arith.constant 0 : i32
    return %c0_i32, %c0_i32_0 : i32, i32
  }
  func.func @transform_4(%arg0: i32) -> (i32, i32) {
    %c0_i32 = arith.constant 0 : i32
    %c0_i32_0 = arith.constant 0 : i32
    return %arg0, %c0_i32 : i32, i32
  }
}

</mosaic_0001>

<llo_original>
// kernel: tpu_custom_call.1
$region0: #{tpu_custom_call.1}
  #allocation0 [shape = 'u32[]', space=smem, size = 0x4, offset = 0x4, fixed_abs, tag = 'smem constant byte address 0x4 - core index']
  #allocation1 [shape = 'u32[144,128]{1,0:T(1,128)}', space=vmem, size = 0x12000, scoped, tag = 'internal scratch']
  %s0 = inlined_call_operand.vmem [shape: f32[32,16], index: 0, kind: input, shape index: {}]
  %s1 = inlined_call_operand.vmem [shape: f32[8,64], index: 1, kind: input, shape index: {}]
  %s2 = inlined_call_operand.vmem [shape: f32[8,1], index: 2, kind: input, shape index: {}]
  %s3 = inlined_call_operand.vmem [shape: f32[8,1], index: 3, kind: input, shape index: {}]
  %s4 = inlined_call_operand.hbm [shape: f32[1,16], index: 4, kind: output, shape index: {}]
  %s5 = sld [smem:[#allocation0]]
  $region26: #{tpu_custom_call.1} parent=0
    _
  %s7 = ssub.s32 1, %s5
  %s8 = scalar_select 0, %s7, %s5
  $region1: #{tpu_custom_call.1} parent=0
    #allocation2 [shape = 'u8[512]{0}', space=vmem, size = 0x400, scoped, tag = 'output window, operand 0, single buffered']
    #allocation3 [shape = 's32[1]{0}', space=sflag, size = 0x4, scoped, tag = 'scoped memory for tpu_custom_call.1']
    %9 = vsyncpa [#allocation3], 0
    // Predicated region
    $region2: #{tpu_custom_call.1} parent=1 // pred_check
      _
    $region3: #{tpu_custom_call.1} parent=1 // pred_check_branch
      %11 = sbr.rel (0) target = $region5
    $region4: #{tpu_custom_call.1} parent=1 // pred_region
      _
    $region5: #{tpu_custom_call.1} parent=1 // pred_fallthru
      _
    // Predicated region
    $region6: #{tpu_custom_call.1} parent=1 // pred_check
      _
    $region7: #{tpu_custom_call.1} parent=1 // pred_check_branch
      %13 = sbr.rel (0) target = $region9
    $region8: #{tpu_custom_call.1} parent=1 // pred_region
      _
    $region9: #{tpu_custom_call.1} parent=1 // pred_fallthru
      _
    // Predicated region
    $region10: #{tpu_custom_call.1} parent=1 // pred_check
      _
    $region11: #{tpu_custom_call.1} parent=1 // pred_check_branch
      %15 = sbr.rel (0) target = $region13
    $region12: #{tpu_custom_call.1} parent=1 // pred_region
      _
    $region13: #{tpu_custom_call.1} parent=1 // pred_fallthru
      _
    // Predicated region
    $region14: #{tpu_custom_call.1} parent=1 // pred_check
      _
    $region15: #{tpu_custom_call.1} parent=1 // pred_check_branch
      %17 = sbr.rel (0) target = $region17
    $region16: #{tpu_custom_call.1} parent=1 // pred_region
      _
    $region17: #{tpu_custom_call.1} parent=1 // pred_fallthru
      _
    %v18 = vld [vmem:[%s0] sm:$0xff]
    %v19 = vld [vmem:[%s0 + $0x8] sm:$0xff]
    %v20 = vld [vmem:[%s0 + $0x10] sm:$0xff]
    %v21 = vld [vmem:[%s0 + $0x18] sm:$0xff]
    %v22 = vmul.f32 %v18, %v18
    %v23 = vmul.f32 %v19, %v19
    %v24 = vmul.f32 %v20, %v20
    %v25 = vmul.f32 %v21, %v21
    %v26 = vld [vmem:[%s1] sm:$0xff]
    %vm27 = vcmask 523264
    %v29 = vsel %vm27, %v26, 0
    %31 = vmatprep.subr.mxu0 0.0
    %32 = vmatpush1.msra.mxu0 %v22
    %33 = vmatprep.subr.mxu0 0.0
    %34 = vmatpush1.msra.mxu0 %v23
    %35 = vmatprep.subr.mxu0 0.0
    %36 = vmatpush1.msra.mxu0 %v24
    %37 = vmatprep.subr.mxu0 0.0
    %38 = vmatpush1.msra.mxu0 %v25
    %39 = vmatprep.subr.mxu0 0.0
    %40 = vmatpush1.msra.mxu0 %v18
    %41 = vmatprep.subr.mxu0 0.0
    %42 = vmatpush1.msra.mxu0 %v19
    %43 = vmatprep.subr.mxu0 0.0
    %44 = vmatpush1.msra.mxu0 %v20
    %45 = vmatprep.subr.mxu0 0.0
    %46 = vmatpush1.msra.mxu0 %v21
    %47 = vmatprep.subr.mxu0 0.0
    %48 = vmatpush1.msra.mxu0 0.0
    %49 = vmatprep.subr.mxu0 0.0
    %50 = vmatpush1.msra.mxu0 0.0
    %51 = vmatprep.subr.mxu0 0.0
    %52 = vmatpush1.msra.mxu0 0.0
    %53 = vmatprep.subr.mxu0 0.0
    %54 = vmatpush1.msra.mxu0 0.0
    %55 = vmatprep.subr.mxu0 0.0
    %56 = vmatpush1.msra.mxu0 0.0
    %57 = vmatprep.subr.mxu0 0.0
    %58 = vmatpush1.msra.mxu0 0.0
    %59 = vmatprep.subr.mxu0 0.0
    %60 = vmatpush1.msra.mxu0 0.0
    %61 = vmatprep.subr.mxu0 0.0
    %62 = vmatpush1.msra.mxu0 0.0
    %63 = vmatprep.subr.mxu0 0.0
    %64 = vmatpush1.msra.mxu0 0.0
    %65 = vmatprep.subr.mxu0 0.0
    %66 = vmatpush1.msra.mxu0 0.0
    %67 = vmatprep.subr.mxu0 0.0
    %68 = vmatpush1.msra.mxu0 0.0
    %69 = vmatprep.subr.mxu0 0.0
    %70 = vmatpush1.msra.mxu0 0.0
    %71 = vmatprep.subr.mxu0 0.0
    %72 = vmatpush1.msra.mxu0 0.0
    %73 = vmatprep.subr.mxu0 0.0
    %74 = vmatpush1.msra.mxu0 0.0
    %75 = vmatprep.subr.mxu0 0.0
    %76 = vmatpush1.msra.mxu0 0.0
    %77 = vmatprep.subr.mxu0 0.0
    %78 = vmatpush1.msra.mxu0 0.0
    %79 = vmatprep.subr.mxu0 0.0
    %80 = vmatpush1.msra.mxu0 0.0
    %81 = vmatprep.subr.mxu0 0.0
    %82 = vmatpush1.msra.mxu0 0.0
    %83 = vmatprep.subr.mxu0 0.0
    %84 = vmatpush1.msra.mxu0 0.0
    %85 = vmatprep.subr.mxu0 0.0
    %86 = vmatpush1.msra.mxu0 0.0
    %87 = vmatprep.subr.mxu0 0.0
    %88 = vmatpush1.msra.mxu0 0.0
    %89 = vmatprep.subr.mxu0 0.0
    %90 = vmatpush1.msra.mxu0 0.0
    %91 = vmatprep.subr.mxu0 0.0
    %92 = vmatpush1.msra.mxu0 0.0
    %93 = vmatprep.subr.mxu0 0.0
    %94 = vmatpush1.msra.mxu0 0.0
    %95 = vmatprep.mubr.f32.mxu0 0.0
    %96 = vmatmul.mubr.f32.gmra.mrb[0].mxu0 %v29
    %v97 = vpop.f32.mrb[0].mxu0
    %v98 = vadd.f32 0.0, %v97
    %v99 = vpop.f32.mrb[0].mxu0
    %100 = vdwg.mxu0
    %v101 = vld [vmem:[%s2] sm:$0xff]
    %103 = vset.pattern.permute.xlu0 0
    %104 = vperm.xlu0 %103, %v101
    %v105 = vpop.permute.xlu0 %104
    %v107 = vsub.f32 %v98, %v105
    %v108 = vmin.f32 %v107, 0.0
    %v109 = vld [vmem:[%s3] sm:$0xff]
    %111 = vset.pattern.permute.xlu0 0
    %112 = vperm.xlu0 %111, %v109
    %v113 = vpop.permute.xlu0 %112
    %v115 = vadd.f32 %v108, %v113
    %vm116 = vcmask 130048
    %v117 = vsel %vm116, %v115, -inf
    %v118 = vrot.slane %v117, 4
    %v119 = vmax.f32 %v117, %v118
    %v120 = vrot.slane %v119, 2
    %v121 = vmax.f32 %v119, %v120
    %v122 = vrot.slane %v121, 1
    %v123 = vmax.f32 %v121, %v122
    %v124 = vsub.f32 %v115, %v123
    %v125 = vmul.f32 %v124, 1.442695
    %v126 = vpow.pop %v125
    %v127 = vsel %vm116, %v126, 0.0
    %v128 = vrot.slane %v127, 4
    %v129 = vadd.f32 %v127, %v128
    %v130 = vrot.slane %v129, 2
    %v131 = vadd.f32 %v129, %v130
    %v132 = vrot.slane %v131, 1
    %v133 = vadd.f32 %v131, %v132
    %v134 = vlog2.pop %v133
    %v135 = vmul.f32 %v134, 0.6931472
    %v136 = vadd.f32 %v123, %v135
    %vm137 = vcmask 122880
    %138 = vst.msk [vmem:[#allocation2] sm:$0x1] %vm137, %v136
    // Predicated region
    $region18: #{tpu_custom_call.1} parent=1 // pred_check
      _
    $region19: #{tpu_custom_call.1} parent=1 // pred_check_branch
      %140 = sbr.rel (0) target = $region21
    $region20: #{tpu_custom_call.1} parent=1 // pred_region
      %s142 = ssub.s32 16, 16
      %143 = vsyncadd [#allocation3], %s142
      %s145 = sshll.u32 [#allocation2], 4
      %s146 = int_to_ptr.vmem [resolvable:$true] %s145
      %148 = dma.vmem_to_hbm [thread:$0]  %s146, 16, %s4, [#allocation3]
    $region21: #{tpu_custom_call.1} parent=1 // pred_fallthru
      _
    // Predicated region
    $region22: #{tpu_custom_call.1} parent=1 // pred_check
      _
    $region23: #{tpu_custom_call.1} parent=1 // pred_check_branch
      %150 = sbr.rel (0) target = $region25
    $region24: #{tpu_custom_call.1} parent=1 // pred_region
      %151 = dma.done [#allocation3], 16
    $region25: #{tpu_custom_call.1} parent=1 // pred_fallthru
      _
    %152 = vsyncpa [#allocation3], 1

</llo_original>
